<compile_context>
chip_gen: v7x
topology: tpu7x:2x2x1
jax: 0.10.0
libtpu: 0.0.40
codegen_flags: <defaults>
</compile_context>

<pallas_src>
import functools
import math

import jax
import jax.numpy as jnp
from jax import lax
from jax.experimental import pallas as pl
from jax.experimental.pallas import tpu as pltpu

_EPS = 1e-5


def _round_up(v, m):
    return ((v + m - 1) // m) * m


def _choose_tile_rows(n_rows, width, itemsize):
    """Row-tile size: ~1 MiB blocks, sublane-aligned, and >= ~8 grid steps."""
    row_align = {4: 8, 2: 16, 1: 32}.get(itemsize, 8)
    target_block_bytes = 1 << 20                      # ~1 MiB per block buffer
    tile = (target_block_bytes // max(width * itemsize, 1)) // row_align * row_align
    tile = max(row_align, tile)
    # Keep >= ~8 grid steps (>= 3-4 per TC on v7x megacore) so the
    # prefetch-next / writeback-prev pipeline stays full on every core.
    steps_cap = max(row_align, _round_up(pl.cdiv(n_rows, 8), row_align))
    return min(tile, steps_cap, 2048, _round_up(n_rows, row_align))


def _split_dot(a_f32, sel_bf16):
    """a @ sel with ~fp32 accuracy using only native bf16 MXU matmuls.

    `sel` is a 0/1 selection matrix (exact in bf16).  Splitting `a` into
    hi + lo bf16 parts bounds the relative error at ~2^-17, comfortably inside
    the 1e-5 comparison tolerance, without relying on any f32-matmul
    precision mode in the lowering.
    """
    a_hi = a_f32.astype(jnp.bfloat16)
    a_lo = (a_f32 - a_hi.astype(jnp.float32)).astype(jnp.bfloat16)
    out = jnp.dot(a_hi, sel_bf16, preferred_element_type=jnp.float32)
    return out + jnp.dot(a_lo, sel_bf16, preferred_element_type=jnp.float32)


def _ln_kernel_mxu(x_ref, w_ref, b_ref, rd_ref, bc_ref, o_ref, *, inv_c):
    # x_ref: (T, W) with W = k*C lane-dense; rd_ref: (W, kp) 0/1 bf16 reduce
    # matrix; bc_ref: (kp, W) 0/1 bf16 broadcast matrix; w_ref/b_ref: (1, W) f32.
    x = x_ref[...].astype(jnp.float32)
    rd = rd_ref[...]
    s1 = _split_dot(x, rd)                       # (T, kp) per-segment sum(x)
    s2 = _split_dot(x * x, rd)                   # (T, kp) per-segment sum(x^2)
    mu = s1 * inv_c
    var = jnp.maximum(s2 * inv_c - mu * mu, 0.0)  # single-pass population var
    inv = lax.rsqrt(var + _EPS)                   # EUP, per segment only
    bc = bc_ref[...]
    mu_b = _split_dot(mu, bc)                    # broadcast back across lanes
    inv_b = _split_dot(inv, bc)
    o_ref[...] = ((x - mu_b) * inv_b * w_ref[...] + b_ref[...]).astype(o_ref.dtype)


def _ln_kernel_simple(x_ref, w_ref, b_ref, o_ref):
    # Fallback when lane packing is not possible: plain lane reductions.
    x = x_ref[...].astype(jnp.float32)
    mu = jnp.mean(x, axis=-1, keepdims=True)
    ex2 = jnp.mean(x * x, axis=-1, keepdims=True)
    var = jnp.maximum(ex2 - mu * mu, 0.0)
    inv = lax.rsqrt(var + _EPS)
    o_ref[...] = ((x - mu) * inv * w_ref[...] + b_ref[...]).astype(o_ref.dtype)


def with_bias_layernorm(x, weight, bias, *, tile_rows=None):
    """LayerNorm over the last axis of x with affine weight/bias of shape (C,)."""
    orig_shape = x.shape
    C = orig_shape[-1]
    assert weight.shape == (C,) and bias.shape == (C,)

    rows = 1
    for d in orig_shape[:-1]:
        rows *= d
    x2d = x.reshape(rows, C)

    # ---- lane-dense packing (pure metadata reshape of contiguous rows) ----
    k = 128 // math.gcd(C, 128)             # smallest k with (k*C) % 128 == 0
    use_mxu = (k > 1) and (rows % k == 0) and (k * C <= 2048)
    if use_mxu:
        W, R = k * C, rows // k
        xp = x2d.reshape(R, W)
    else:
        # TODO(synk): C % 128 == 0 could also route through the MXU-reduction
        # path; left on the simple lane-reduction path for now.
        k, W, R = 1, C, rows
        xp = x2d

    # weight / bias pre-cast to fp32 once in the wrapper (no per-step casts).
    w32 = weight.astype(jnp.float32)
    b32 = bias.astype(jnp.float32)
    w_in = (jnp.tile(w32, (k,)) if k > 1 else w32).reshape(1, W)
    b_in = (jnp.tile(b32, (k,)) if k > 1 else b32).reshape(1, W)

    itemsize = jnp.dtype(x.dtype).itemsize
    if tile_rows is None:
        tile_rows = _choose_tile_rows(R, W, itemsize)
    grid = (pl.cdiv(R, tile_rows),)

    # VMEM limit: double-buffered in/out blocks + ~4 tile-sized fp32
    # temporaries + margin (no blanket half-of-VMEM reservation).
    est = 4 * tile_rows * W * itemsize + 4 * tile_rows * W * 4 + (4 << 20)
    vmem_limit = int(min(64 << 20, max(16 << 20, est)))

    cost = pl.CostEstimate(
        flops=12 * rows * C,
        transcendentals=rows,
        bytes_accessed=2 * rows * C * itemsize + 2 * C * 4,
    )

    x_spec = pl.BlockSpec((tile_rows, W), lambda i: (i, 0))
    wb_spec = pl.BlockSpec((1, W), lambda i: (0, 0))
    out_spec = pl.BlockSpec((tile_rows, W), lambda i: (i, 0))
    common = dict(
        out_shape=jax.ShapeDtypeStruct((R, W), x.dtype),
        compiler_params=pltpu.CompilerParams(
            dimension_semantics=("parallel",),
            vmem_limit_bytes=vmem_limit,
        ),
        cost_estimate=cost,
    )

    if use_mxu:
        # 0/1 selection matrices: rd reduces each C-lane segment, bc broadcasts
        # a per-segment scalar back to its C lanes.  Column count padded to >= 8
        # so every matmul minor dim is sublane-aligned; padded columns are all
        # zero and contribute nothing.
        kp = max(k, 8)
        lane_seg = jnp.arange(W, dtype=jnp.int32) // C
        cols = jnp.arange(kp, dtype=jnp.int32)
        rd = (lane_seg[:, None] == cols[None, :]).astype(jnp.bfloat16)   # (W, kp)
        bc = rd.T                                                        # (kp, W)
        kern = functools.partial(_ln_kernel_mxu, inv_c=float(1.0 / C))
        out = pl.pallas_call(
            kern,
            grid_spec=pltpu.PrefetchScalarGridSpec(
                num_scalar_prefetch=0,
                grid=grid,
                in_specs=[x_spec, wb_spec, wb_spec,
                          pl.BlockSpec((W, kp), lambda i: (0, 0)),
                          pl.BlockSpec((kp, W), lambda i: (0, 0))],
                out_specs=out_spec,
            ),
            **common,
        )(xp, w_in, b_in, rd, bc)
    else:
        # Ragged last block: rows are independent, OOB rows are never written
        # (documented Pallas masking behavior).
        out = pl.pallas_call(
            _ln_kernel_simple,
            grid_spec=pltpu.PrefetchScalarGridSpec(
                num_scalar_prefetch=0,
                grid=grid,
                in_specs=[x_spec, wb_spec, wb_spec],
                out_specs=out_spec,
            ),
            **common,
        )(xp, w_in, b_in)

    return out.reshape(orig_shape)


def _reference_layernorm(x, weight, bias):
    x32 = x.astype(jnp.float32)
    mu = jnp.mean(x32, axis=-1, keepdims=True)
    sigma = jnp.mean((x32 - mu) ** 2, axis=-1, keepdims=True)
    out = (x32 - mu) / jnp.sqrt(sigma + _EPS) * weight.astype(jnp.float32) \
        + bias.astype(jnp.float32)
    return out.astype(x.dtype)


if __name__ == "__main__":
    key = jax.random.PRNGKey(0)
    k0, k1, k2, k3, k4, k5 = jax.random.split(key, 6)

    # Test 1: module-default params (weight=ones, bias=zeros); C=32 packs to a
    # 128-lane slab (k=4) -> lane-dense MXU-reduction path.
    x1 = jax.random.normal(k0, (2, 16, 32), dtype=jnp.float32)
    w1 = jnp.ones((32,), jnp.float32)
    b1 = jnp.zeros((32,), jnp.float32)
    o1 = jax.block_until_ready(with_bias_layernorm(x1, w1, b1))
    r1 = _reference_layernorm(x1, w1, b1)
    assert o1.shape == x1.shape and o1.dtype == x1.dtype
    assert jnp.allclose(o1, r1, atol=2e-5, rtol=2e-5), \
        float(jnp.max(jnp.abs(o1 - r1)))

    # Test 2: LEWLE-like C=48 (packs to 384 lanes, k=8), random affine params,
    # ragged last row-block on the packed/MXU path.
    x2 = jax.random.normal(k1, (2, 72, 48), dtype=jnp.float32)
    w2 = jax.random.normal(k2, (48,), jnp.float32)
    b2 = jax.random.normal(k3, (48,), jnp.float32)
    o2 = jax.block_until_ready(with_bias_layernorm(x2, w2, b2))
    r2 = _reference_layernorm(x2, w2, b2)
    assert jnp.allclose(o2, r2, atol=2e-5, rtol=2e-5), \
        float(jnp.max(jnp.abs(o2 - r2)))

    # Test 3: row count (15) not divisible by the pack factor -> unpacked
    # fallback path with a ragged (masked) last block.
    x3 = jax.random.normal(k4, (3, 5, 32), dtype=jnp.float32)
    w3 = jax.random.normal(k5, (32,), jnp.float32)
    b3 = jax.random.normal(k0, (32,), jnp.float32)
    o3 = jax.block_until_ready(with_bias_layernorm(x3, w3, b3))
    r3 = _reference_layernorm(x3, w3, b3)
    assert jnp.allclose(o3, r3, atol=2e-5, rtol=2e-5), \
        float(jnp.max(jnp.abs(o3 - r3)))

    print("KERNEL_OK")
</pallas_src>

<mosaic_0001>
module attributes {stable_mosaic.version = 11 : i64} {
  func.func @_ln_kernel_mxu(%arg0: i32, %arg1: memref<8x128xf32, #tpu.memory_space<vmem>>, %arg2: memref<1x128xf32, #tpu.memory_space<vmem>>, %arg3: memref<1x128xf32, #tpu.memory_space<vmem>>, %arg4: memref<128x8xbf16, #tpu.memory_space<vmem>>, %arg5: memref<8x128xbf16, #tpu.memory_space<vmem>>, %arg6: memref<8x128xf32, #tpu.memory_space<vmem>>) attributes {dimension_semantics = [#tpu.dimension_semantics<parallel>], iteration_bounds = array<i64: 1>, scalar_prefetch = 0 : i64, scratch_operands = 0 : i64, tpu.core_type = #tpu.core_type<tc>, window_params = [{transform_indices = @transform_0, window_bounds = array<i64: 8, 128>}, {pipeline_mode = #tpu.pipeline_mode<synchronous>, transform_indices = @transform_1, window_bounds = array<i64: 1, 128>}, {pipeline_mode = #tpu.pipeline_mode<synchronous>, transform_indices = @transform_2, window_bounds = array<i64: 1, 128>}, {pipeline_mode = #tpu.pipeline_mode<synchronous>, transform_indices = @transform_3, window_bounds = array<i64: 128, 8>}, {pipeline_mode = #tpu.pipeline_mode<synchronous>, transform_indices = @transform_4, window_bounds = array<i64: 8, 128>}, {transform_indices = @transform_5, window_bounds = array<i64: 8, 128>}]} {
    %c0 = arith.constant 0 : index
    %c0_0 = arith.constant 0 : index
    %0 = vector.load %arg1[%c0, %c0_0] : memref<8x128xf32, #tpu.memory_space<vmem>>, vector<8x128xf32>
    %c0_1 = arith.constant 0 : index
    %c0_2 = arith.constant 0 : index
    %1 = vector.load %arg4[%c0_1, %c0_2] : memref<128x8xbf16, #tpu.memory_space<vmem>>, vector<128x8xbf16>
    %2 = arith.truncf %0 : vector<8x128xf32> to vector<8x128xbf16>
    %3 = arith.extf %2 : vector<8x128xbf16> to vector<8x128xf32>
    %4 = arith.subf %0, %3 : vector<8x128xf32>
    %5 = arith.truncf %4 : vector<8x128xf32> to vector<8x128xbf16>
    %cst = arith.constant dense<0.000000e+00> : vector<8x8xf32>
    %6 = tpu.matmul %2, %1, %cst {dimension_numbers = #tpu.dot_dimension_numbers<[1], [0], [0], [1], [0, 0, 1, 1], [], []>} : vector<8x128xbf16>, vector<128x8xbf16>, vector<8x8xf32> -> vector<8x8xf32>
    %cst_3 = arith.constant dense<0.000000e+00> : vector<8x8xf32>
    %7 = tpu.matmul %5, %1, %cst_3 {dimension_numbers = #tpu.dot_dimension_numbers<[1], [0], [0], [1], [0, 0, 1, 1], [], []>} : vector<8x128xbf16>, vector<128x8xbf16>, vector<8x8xf32> -> vector<8x8xf32>
    %8 = arith.addf %6, %7 : vector<8x8xf32>
    %9 = arith.mulf %0, %0 : vector<8x128xf32>
    %10 = arith.truncf %9 : vector<8x128xf32> to vector<8x128xbf16>
    %11 = arith.extf %10 : vector<8x128xbf16> to vector<8x128xf32>
    %12 = arith.subf %9, %11 : vector<8x128xf32>
    %13 = arith.truncf %12 : vector<8x128xf32> to vector<8x128xbf16>
    %cst_4 = arith.constant dense<0.000000e+00> : vector<8x8xf32>
    %14 = tpu.matmul %10, %1, %cst_4 {dimension_numbers = #tpu.dot_dimension_numbers<[1], [0], [0], [1], [0, 0, 1, 1], [], []>} : vector<8x128xbf16>, vector<128x8xbf16>, vector<8x8xf32> -> vector<8x8xf32>
    %cst_5 = arith.constant dense<0.000000e+00> : vector<8x8xf32>
    %15 = tpu.matmul %13, %1, %cst_5 {dimension_numbers = #tpu.dot_dimension_numbers<[1], [0], [0], [1], [0, 0, 1, 1], [], []>} : vector<8x128xbf16>, vector<128x8xbf16>, vector<8x8xf32> -> vector<8x8xf32>
    %16 = arith.addf %14, %15 : vector<8x8xf32>
    %cst_6 = arith.constant 3.125000e-02 : f32
    %17 = vector.broadcast %cst_6 : f32 to vector<8x8xf32>
    %18 = arith.mulf %8, %17 : vector<8x8xf32>
    %cst_7 = arith.constant 3.125000e-02 : f32
    %19 = vector.broadcast %cst_7 : f32 to vector<8x8xf32>
    %20 = arith.mulf %16, %19 : vector<8x8xf32>
    %21 = arith.mulf %18, %18 : vector<8x8xf32>
    %22 = arith.subf %20, %21 : vector<8x8xf32>
    %cst_8 = arith.constant 0.000000e+00 : f32
    %23 = vector.broadcast %cst_8 : f32 to vector<8x8xf32>
    %24 = arith.maximumf %22, %23 : vector<8x8xf32>
    %cst_9 = arith.constant 9.99999974E-6 : f32
    %25 = vector.broadcast %cst_9 : f32 to vector<8x8xf32>
    %26 = arith.addf %24, %25 : vector<8x8xf32>
    %27 = math.rsqrt %26 : vector<8x8xf32>
    %c0_10 = arith.constant 0 : index
    %c0_11 = arith.constant 0 : index
    %28 = vector.load %arg5[%c0_10, %c0_11] : memref<8x128xbf16, #tpu.memory_space<vmem>>, vector<8x128xbf16>
    %29 = arith.truncf %18 : vector<8x8xf32> to vector<8x8xbf16>
    %30 = arith.extf %29 : vector<8x8xbf16> to vector<8x8xf32>
    %31 = arith.subf %18, %30 : vector<8x8xf32>
    %32 = arith.truncf %31 : vector<8x8xf32> to vector<8x8xbf16>
    %cst_12 = arith.constant dense<0.000000e+00> : vector<8x128xf32>
    %33 = tpu.matmul %29, %28, %cst_12 {dimension_numbers = #tpu.dot_dimension_numbers<[1], [0], [0], [1], [0, 0, 1, 1], [], []>} : vector<8x8xbf16>, vector<8x128xbf16>, vector<8x128xf32> -> vector<8x128xf32>
    %cst_13 = arith.constant dense<0.000000e+00> : vector<8x128xf32>
    %34 = tpu.matmul %32, %28, %cst_13 {dimension_numbers = #tpu.dot_dimension_numbers<[1], [0], [0], [1], [0, 0, 1, 1], [], []>} : vector<8x8xbf16>, vector<8x128xbf16>, vector<8x128xf32> -> vector<8x128xf32>
    %35 = arith.addf %33, %34 : vector<8x128xf32>
    %36 = arith.truncf %27 : vector<8x8xf32> to vector<8x8xbf16>
    %37 = arith.extf %36 : vector<8x8xbf16> to vector<8x8xf32>
    %38 = arith.subf %27, %37 : vector<8x8xf32>
    %39 = arith.truncf %38 : vector<8x8xf32> to vector<8x8xbf16>
    %cst_14 = arith.constant dense<0.000000e+00> : vector<8x128xf32>
    %40 = tpu.matmul %36, %28, %cst_14 {dimension_numbers = #tpu.dot_dimension_numbers<[1], [0], [0], [1], [0, 0, 1, 1], [], []>} : vector<8x8xbf16>, vector<8x128xbf16>, vector<8x128xf32> -> vector<8x128xf32>
    %cst_15 = arith.constant dense<0.000000e+00> : vector<8x128xf32>
    %41 = tpu.matmul %39, %28, %cst_15 {dimension_numbers = #tpu.dot_dimension_numbers<[1], [0], [0], [1], [0, 0, 1, 1], [], []>} : vector<8x8xbf16>, vector<8x128xbf16>, vector<8x128xf32> -> vector<8x128xf32>
    %42 = arith.addf %40, %41 : vector<8x128xf32>
    %43 = arith.subf %0, %35 : vector<8x128xf32>
    %44 = arith.mulf %43, %42 : vector<8x128xf32>
    %c0_16 = arith.constant 0 : index
    %c0_17 = arith.constant 0 : index
    %45 = vector.load %arg2[%c0_16, %c0_17] : memref<1x128xf32, #tpu.memory_space<vmem>>, vector<1x128xf32>
    %46 = vector.broadcast %45 : vector<1x128xf32> to vector<8x128xf32>
    %47 = arith.mulf %44, %46 : vector<8x128xf32>
    %c0_18 = arith.constant 0 : index
    %c0_19 = arith.constant 0 : index
    %48 = vector.load %arg3[%c0_18, %c0_19] : memref<1x128xf32, #tpu.memory_space<vmem>>, vector<1x128xf32>
    %49 = vector.broadcast %48 : vector<1x128xf32> to vector<8x128xf32>
    %50 = arith.addf %47, %49 : vector<8x128xf32>
    %c0_20 = arith.constant 0 : index
    %c0_21 = arith.constant 0 : index
    %51 = vector.load %arg6[%c0_20, %c0_21] : memref<8x128xf32, #tpu.memory_space<vmem>>, vector<8x128xf32>
    tpu.vector_store %arg6[%c0_20, %c0_21], %50 {strides = array<i32>} : memref<8x128xf32, #tpu.memory_space<vmem>>, vector<8x128xf32>,
    return
  }
  func.func @transform_0(%arg0: i32) -> (i32, i32) {
    %c0_i32 = arith.constant 0 : i32
    %c0_i32_0 = arith.constant 0 : i32
    return %arg0, %c0_i32 : i32, i32
  }
  func.func @transform_1(%arg0: i32) -> (i32, i32) {
    %c0_i32 = arith.constant 0 : i32
    %c0_i32_0 = arith.constant 0 : i32
    %c0_i32_1 = arith.constant 0 : i32
    return %c0_i32, %c0_i32_0 : i32, i32
  }
  func.func @transform_2(%arg0: i32) -> (i32, i32) {
    %c0_i32 = arith.constant 0 : i32
    %c0_i32_0 = arith.constant 0 : i32
    %c0_i32_1 = arith.constant 0 : i32
    return %c0_i32, %c0_i32_0 : i32, i32
  }
  func.func @transform_3(%arg0: i32) -> (i32, i32) {
    %c0_i32 = arith.constant 0 : i32
    %c0_i32_0 = arith.constant 0 : i32
    %c0_i32_1 = arith.constant 0 : i32
    return %c0_i32, %c0_i32_0 : i32, i32
  }
  func.func @transform_4(%arg0: i32) -> (i32, i32) {
    %c0_i32 = arith.constant 0 : i32
    %c0_i32_0 = arith.constant 0 : i32
    %c0_i32_1 = arith.constant 0 : i32
    return %c0_i32, %c0_i32_0 : i32, i32
  }
  func.func @transform_5(%arg0: i32) -> (i32, i32) {
    %c0_i32 = arith.constant 0 : i32
    %c0_i32_0 = arith.constant 0 : i32
    return %arg0, %c0_i32 : i32, i32
  }
}

</mosaic_0001>

<llo_original>
// kernel: tpu_custom_call.1
$region0: #{tpu_custom_call.1}
  #allocation0 [shape = 'u32[]', space=smem, size = 0x4, offset = 0x4, fixed_abs, tag = 'smem constant byte address 0x4 - core index']
  #allocation1 [shape = 'u32[144,128]{1,0:T(1,128)}', space=vmem, size = 0x12000, scoped, tag = 'internal scratch']
  %s0 = inlined_call_operand.vmem [shape: f32[8,128], index: 0, kind: input, shape index: {}]
  %s1 = inlined_call_operand.vmem [shape: f32[1,128], index: 1, kind: input, shape index: {}]
  %s2 = inlined_call_operand.vmem [shape: f32[1,128], index: 2, kind: input, shape index: {}]
  %s3 = inlined_call_operand.vmem [shape: bf16[128,8], index: 3, kind: input, shape index: {}]
  %s4 = inlined_call_operand.vmem [shape: bf16[8,128], index: 4, kind: input, shape index: {}]
  %s5 = inlined_call_operand.hbm [shape: f32[8,128], index: 5, kind: output, shape index: {}]
  %s6 = sld [smem:[#allocation0]]
  $region30: #{tpu_custom_call.1} parent=0
    _
  %s8 = ssub.s32 1, %s6
  %s9 = scalar_select 0, %s8, %s6
  $region1: #{tpu_custom_call.1} parent=0
    #allocation2 [shape = 'u8[4096]{0}', space=vmem, size = 0x1000, scoped, tag = 'output window, operand 0, single buffered']
    #allocation3 [shape = 's32[1]{0}', space=sflag, size = 0x4, scoped, tag = 'scoped memory for tpu_custom_call.1']
    %10 = vsyncpa [#allocation3], 0
    // Predicated region
    $region2: #{tpu_custom_call.1} parent=1 // pred_check
      _
    $region3: #{tpu_custom_call.1} parent=1 // pred_check_branch
      %12 = sbr.rel (0) target = $region5
    $region4: #{tpu_custom_call.1} parent=1 // pred_region
      _
    $region5: #{tpu_custom_call.1} parent=1 // pred_fallthru
      _
    // Predicated region
    $region6: #{tpu_custom_call.1} parent=1 // pred_check
      _
    $region7: #{tpu_custom_call.1} parent=1 // pred_check_branch
      %14 = sbr.rel (0) target = $region9
    $region8: #{tpu_custom_call.1} parent=1 // pred_region
      _
    $region9: #{tpu_custom_call.1} parent=1 // pred_fallthru
      _
    // Predicated region
    $region10: #{tpu_custom_call.1} parent=1 // pred_check
      _
    $region11: #{tpu_custom_call.1} parent=1 // pred_check_branch
      %16 = sbr.rel (0) target = $region13
    $region12: #{tpu_custom_call.1} parent=1 // pred_region
      _
    $region13: #{tpu_custom_call.1} parent=1 // pred_fallthru
      _
    // Predicated region
    $region14: #{tpu_custom_call.1} parent=1 // pred_check
      _
    $region15: #{tpu_custom_call.1} parent=1 // pred_check_branch
      %18 = sbr.rel (0) target = $region17
    $region16: #{tpu_custom_call.1} parent=1 // pred_region
      _
    $region17: #{tpu_custom_call.1} parent=1 // pred_fallthru
      _
    // Predicated region
    $region18: #{tpu_custom_call.1} parent=1 // pred_check
      _
    $region19: #{tpu_custom_call.1} parent=1 // pred_check_branch
      %20 = sbr.rel (0) target = $region21
    $region20: #{tpu_custom_call.1} parent=1 // pred_region
      _
    $region21: #{tpu_custom_call.1} parent=1 // pred_fallthru
      _
    %v22 = vld [vmem:[%s0] sm:$0xff]
    %v23 = vld [vmem:[%s3] sm:$0xf]
    %v24 = vld [vmem:[%s3 + $0x4] sm:$0xf]
    %v25 = vld [vmem:[%s3 + $0x8] sm:$0xf]
    %v26 = vld [vmem:[%s3 + $0xc] sm:$0xf]
    %v27 = vld [vmem:[%s3 + $0x10] sm:$0xf]
    %v28 = vld [vmem:[%s3 + $0x14] sm:$0xf]
    %v29 = vld [vmem:[%s3 + $0x18] sm:$0xf]
    %v30 = vld [vmem:[%s3 + $0x1c] sm:$0xf]
    %v31 = vld [vmem:[%s3 + $0x20] sm:$0xf]
    %v32 = vld [vmem:[%s3 + $0x24] sm:$0xf]
    %v33 = vld [vmem:[%s3 + $0x28] sm:$0xf]
    %v34 = vld [vmem:[%s3 + $0x2c] sm:$0xf]
    %v35 = vld [vmem:[%s3 + $0x30] sm:$0xf]
    %v36 = vld [vmem:[%s3 + $0x34] sm:$0xf]
    %v37 = vld [vmem:[%s3 + $0x38] sm:$0xf]
    %v38 = vld [vmem:[%s3 + $0x3c] sm:$0xf]
    %v39 = vpack.c.bf16 %v22, %v22
    %v40 = vunpack.c.l.bf16 %v39
    %v41 = vsub.f32 %v22, %v40
    %v42 = vpack.c.bf16 %v41, %v41
    %v59 = vunpack.c.l.b16 %v23
    %v60 = vunpack.c.l.b16 %v24
    %v61 = vunpack.c.l.b16 %v25
    %v62 = vunpack.c.l.b16 %v26
    %v63 = vunpack.c.l.b16 %v27
    %v64 = vunpack.c.l.b16 %v28
    %v65 = vunpack.c.l.b16 %v29
    %v66 = vunpack.c.l.b16 %v30
    %v67 = vunpack.c.l.b16 %v31
    %v68 = vunpack.c.l.b16 %v32
    %v69 = vunpack.c.l.b16 %v33
    %v70 = vunpack.c.l.b16 %v34
    %v71 = vunpack.c.l.b16 %v35
    %v72 = vunpack.c.l.b16 %v36
    %v73 = vunpack.c.l.b16 %v37
    %v74 = vunpack.c.l.b16 %v38
    %v75 = vpack.c.b16 %v60, %v59
    %v76 = vpack.c.b16 %v62, %v61
    %v77 = vpack.c.b16 %v64, %v63
    %v78 = vpack.c.b16 %v66, %v65
    %v79 = vpack.c.b16 %v68, %v67
    %v80 = vpack.c.b16 %v70, %v69
    %v81 = vpack.c.b16 %v72, %v71
    %v82 = vpack.c.b16 %v74, %v73
    %91 = vmatprep.subr.bf16.mxu0 0
    %92 = vmatpush1.bf16.msra.mxu0 %v75
    %93 = vmatprep.subr.bf16.mxu0 0
    %94 = vmatpush1.bf16.msra.mxu0 %v76
    %95 = vmatprep.subr.bf16.mxu0 0
    %96 = vmatpush1.bf16.msra.mxu0 %v77
    %97 = vmatprep.subr.bf16.mxu0 0
    %98 = vmatpush1.bf16.msra.mxu0 %v78
    %99 = vmatprep.subr.bf16.mxu0 0
    %100 = vmatpush1.bf16.msra.mxu0 %v79
    %101 = vmatprep.subr.bf16.mxu0 0
    %102 = vmatpush1.bf16.msra.mxu0 %v80
    %103 = vmatprep.subr.bf16.mxu0 0
    %104 = vmatpush1.bf16.msra.mxu0 %v81
    %105 = vmatprep.subr.bf16.mxu0 0
    %106 = vmatpush1.bf16.msra.mxu0 %v82
    %107 = vmatprep.subr.bf16.mxu0 0
    %108 = vmatpush1.bf16.msra.mxu0 0
    %109 = vmatprep.subr.bf16.mxu0 0
    %110 = vmatpush1.bf16.msra.mxu0 0
    %111 = vmatprep.subr.bf16.mxu0 0
    %112 = vmatpush1.bf16.msra.mxu0 0
    %113 = vmatprep.subr.bf16.mxu0 0
    %114 = vmatpush1.bf16.msra.mxu0 0
    %115 = vmatprep.subr.bf16.mxu0 0
    %116 = vmatpush1.bf16.msra.mxu0 0
    %117 = vmatprep.subr.bf16.mxu0 0
    %118 = vmatpush1.bf16.msra.mxu0 0
    %119 = vmatprep.subr.bf16.mxu0 0
    %120 = vmatpush1.bf16.msra.mxu0 0
    %121 = vmatprep.subr.bf16.mxu0 0
    %122 = vmatpush1.bf16.msra.mxu0 0
    %123 = vmatprep.mubr.bf16.mxu0 0
    %124 = vmatmul.mubr.bf16.gmra.mrb[0].mxu0 %v42
    %v125 = vpop.f32.mrb[0].mxu0
    %v126 = vadd.f32 0.0, %v125
    %v127 = vpop.f32.mrb[0].mxu0
    %v128 = vpop.f32.mrb[0].mxu0
    %v129 = vpop.f32.mrb[0].mxu0
    %130 = vdwg.mxu0
    %131 = vmatprep.subr.bf16.mxu0 0
    %132 = vmatpush1.bf16.msra.mxu0 %v75
    %133 = vmatprep.subr.bf16.mxu0 0
    %134 = vmatpush1.bf16.msra.mxu0 %v76
    %135 = vmatprep.subr.bf16.mxu0 0
    %136 = vmatpush1.bf16.msra.mxu0 %v77
    %137 = vmatprep.subr.bf16.mxu0 0
    %138 = vmatpush1.bf16.msra.mxu0 %v78
    %139 = vmatprep.subr.bf16.mxu0 0
    %140 = vmatpush1.bf16.msra.mxu0 %v79
    %141 = vmatprep.subr.bf16.mxu0 0
    %142 = vmatpush1.bf16.msra.mxu0 %v80
    %143 = vmatprep.subr.bf16.mxu0 0
    %144 = vmatpush1.bf16.msra.mxu0 %v81
    %145 = vmatprep.subr.bf16.mxu0 0
    %146 = vmatpush1.bf16.msra.mxu0 %v82
    %147 = vmatprep.subr.bf16.mxu0 0
    %148 = vmatpush1.bf16.msra.mxu0 0
    %149 = vmatprep.subr.bf16.mxu0 0
    %150 = vmatpush1.bf16.msra.mxu0 0
    %151 = vmatprep.subr.bf16.mxu0 0
    %152 = vmatpush1.bf16.msra.mxu0 0
    %153 = vmatprep.subr.bf16.mxu0 0
    %154 = vmatpush1.bf16.msra.mxu0 0
    %155 = vmatprep.subr.bf16.mxu0 0
    %156 = vmatpush1.bf16.msra.mxu0 0
    %157 = vmatprep.subr.bf16.mxu0 0
    %158 = vmatpush1.bf16.msra.mxu0 0
    %159 = vmatprep.subr.bf16.mxu0 0
    %160 = vmatpush1.bf16.msra.mxu0 0
    %161 = vmatprep.subr.bf16.mxu0 0
    %162 = vmatpush1.bf16.msra.mxu0 0
    %163 = vmatprep.mubr.bf16.mxu0 0
    %164 = vmatmul.mubr.bf16.gmra.mrb[0].mxu0 %v39
    %v165 = vpop.f32.mrb[0].mxu0
    %v166 = vadd.f32 %v126, %v165
    %v167 = vpop.f32.mrb[0].mxu0
    %v168 = vpop.f32.mrb[0].mxu0
    %v169 = vpop.f32.mrb[0].mxu0
    %170 = vdwg.mxu0
    %v171 = vmul.f32 %v22, %v22
    %v172 = vpack.c.bf16 %v171, %v171
    %v173 = vunpack.c.l.bf16 %v172
    %v174 = vsub.f32 %v171, %v173
    %v175 = vpack.c.bf16 %v174, %v174
    %176 = vmatprep.subr.bf16.mxu0 0
    %177 = vmatpush1.bf16.msra.mxu0 %v75
    %178 = vmatprep.subr.bf16.mxu0 0
    %179 = vmatpush1.bf16.msra.mxu0 %v76
    %180 = vmatprep.subr.bf16.mxu0 0
    %181 = vmatpush1.bf16.msra.mxu0 %v77
    %182 = vmatprep.subr.bf16.mxu0 0
    %183 = vmatpush1.bf16.msra.mxu0 %v78
    %184 = vmatprep.subr.bf16.mxu0 0
    %185 = vmatpush1.bf16.msra.mxu0 %v79
    %186 = vmatprep.subr.bf16.mxu0 0
    %187 = vmatpush1.bf16.msra.mxu0 %v80
    %188 = vmatprep.subr.bf16.mxu0 0
    %189 = vmatpush1.bf16.msra.mxu0 %v81
    %190 = vmatprep.subr.bf16.mxu0 0
    %191 = vmatpush1.bf16.msra.mxu0 %v82
    %192 = vmatprep.subr.bf16.mxu0 0
    %193 = vmatpush1.bf16.msra.mxu0 0
    %194 = vmatprep.subr.bf16.mxu0 0
    %195 = vmatpush1.bf16.msra.mxu0 0
    %196 = vmatprep.subr.bf16.mxu0 0
    %197 = vmatpush1.bf16.msra.mxu0 0
    %198 = vmatprep.subr.bf16.mxu0 0
    %199 = vmatpush1.bf16.msra.mxu0 0
    %200 = vmatprep.subr.bf16.mxu0 0
    %201 = vmatpush1.bf16.msra.mxu0 0
    %202 = vmatprep.subr.bf16.mxu0 0
    %203 = vmatpush1.bf16.msra.mxu0 0
    %204 = vmatprep.subr.bf16.mxu0 0
    %205 = vmatpush1.bf16.msra.mxu0 0
    %206 = vmatprep.subr.bf16.mxu0 0
    %207 = vmatpush1.bf16.msra.mxu0 0
    %208 = vmatprep.mubr.bf16.mxu0 0
    %209 = vmatmul.mubr.bf16.gmra.mrb[0].mxu0 %v175
    %v210 = vpop.f32.mrb[0].mxu0
    %v211 = vadd.f32 0.0, %v210
    %v212 = vpop.f32.mrb[0].mxu0
    %v213 = vpop.f32.mrb[0].mxu0
    %v214 = vpop.f32.mrb[0].mxu0
    %215 = vdwg.mxu0
    %216 = vmatprep.subr.bf16.mxu0 0
    %217 = vmatpush1.bf16.msra.mxu0 %v75
    %218 = vmatprep.subr.bf16.mxu0 0
    %219 = vmatpush1.bf16.msra.mxu0 %v76
    %220 = vmatprep.subr.bf16.mxu0 0
    %221 = vmatpush1.bf16.msra.mxu0 %v77
    %222 = vmatprep.subr.bf16.mxu0 0
    %223 = vmatpush1.bf16.msra.mxu0 %v78
    %224 = vmatprep.subr.bf16.mxu0 0
    %225 = vmatpush1.bf16.msra.mxu0 %v79
    %226 = vmatprep.subr.bf16.mxu0 0
    %227 = vmatpush1.bf16.msra.mxu0 %v80
    %228 = vmatprep.subr.bf16.mxu0 0
    %229 = vmatpush1.bf16.msra.mxu0 %v81
    %230 = vmatprep.subr.bf16.mxu0 0
    %231 = vmatpush1.bf16.msra.mxu0 %v82
    %232 = vmatprep.subr.bf16.mxu0 0
    %233 = vmatpush1.bf16.msra.mxu0 0
    %234 = vmatprep.subr.bf16.mxu0 0
    %235 = vmatpush1.bf16.msra.mxu0 0
    %236 = vmatprep.subr.bf16.mxu0 0
    %237 = vmatpush1.bf16.msra.mxu0 0
    %238 = vmatprep.subr.bf16.mxu0 0
    %239 = vmatpush1.bf16.msra.mxu0 0
    %240 = vmatprep.subr.bf16.mxu0 0
    %241 = vmatpush1.bf16.msra.mxu0 0
    %242 = vmatprep.subr.bf16.mxu0 0
    %243 = vmatpush1.bf16.msra.mxu0 0
    %244 = vmatprep.subr.bf16.mxu0 0
    %245 = vmatpush1.bf16.msra.mxu0 0
    %246 = vmatprep.subr.bf16.mxu0 0
    %247 = vmatpush1.bf16.msra.mxu0 0
    %248 = vmatprep.mubr.bf16.mxu0 0
    %249 = vmatmul.mubr.bf16.gmra.mrb[0].mxu0 %v172
    %v250 = vpop.f32.mrb[0].mxu0
    %v251 = vadd.f32 %v211, %v250
    %v252 = vpop.f32.mrb[0].mxu0
    %v253 = vpop.f32.mrb[0].mxu0
    %v254 = vpop.f32.mrb[0].mxu0
    %255 = vdwg.mxu0
    %v256 = vmul.f32 %v166, 0.03125
    %v257 = vmul.f32 %v251, 0.03125
    %v258 = vmul.f32 %v256, %v256
    %v259 = vsub.f32 %v257, %v258
    %v260 = vmax.f32 %v259, 0.0
    %v261 = vadd.f32 %v260, 1e-05
    %v262 = vrsqrt.pop %v261
    %v263 = vld [vmem:[%s4] sm:$0xf]
    %v264 = vpack.c.bf16 %v256, %v256
    %v265 = vunpack.c.l.bf16 %v264
    %v266 = vsub.f32 %v256, %v265
    %v267 = vpack.c.bf16 %v266, %v266
    %vm268 = vcmask 64512
    %v270 = vsel %vm268, %v267, 0
    %vm272 = vcmask 1043456
    %v274 = vsel %vm272, %v263, 0
    %276 = vmatprep.subr.bf16.mxu0 0
    %277 = vmatpush1.bf16.msra.mxu0 %v274
    %278 = vmatprep.subr.bf16.mxu0 0
    %279 = vmatpush1.bf16.msra.mxu0 0
    %280 = vmatprep.subr.bf16.mxu0 0
    %281 = vmatpush1.bf16.msra.mxu0 0
    %282 = vmatprep.subr.bf16.mxu0 0
    %283 = vmatpush1.bf16.msra.mxu0 0
    %284 = vmatprep.subr.bf16.mxu0 0
    %285 = vmatpush1.bf16.msra.mxu0 0
    %286 = vmatprep.subr.bf16.mxu0 0
    %287 = vmatpush1.bf16.msra.mxu0 0
    %288 = vmatprep.subr.bf16.mxu0 0
    %289 = vmatpush1.bf16.msra.mxu0 0
    %290 = vmatprep.subr.bf16.mxu0 0
    %291 = vmatpush1.bf16.msra.mxu0 0
    %292 = vmatprep.subr.bf16.mxu0 0
    %293 = vmatpush1.bf16.msra.mxu0 0
    %294 = vmatprep.subr.bf16.mxu0 0
    %295 = vmatpush1.bf16.msra.mxu0 0
    %296 = vmatprep.subr.bf16.mxu0 0
    %297 = vmatpush1.bf16.msra.mxu0 0
    %298 = vmatprep.subr.bf16.mxu0 0
    %299 = vmatpush1.bf16.msra.mxu0 0
    %300 = vmatprep.subr.bf16.mxu0 0
    %301 = vmatpush1.bf16.msra.mxu0 0
    %302 = vmatprep.subr.bf16.mxu0 0
    %303 = vmatpush1.bf16.msra.mxu0 0
    %304 = vmatprep.subr.bf16.mxu0 0
    %305 = vmatpush1.bf16.msra.mxu0 0
    %306 = vmatprep.subr.bf16.mxu0 0
    %307 = vmatpush1.bf16.msra.mxu0 0
    %308 = vmatprep.mubr.bf16.mxu0 0
    %309 = vmatmul.mubr.bf16.gmra.mrb[0].mxu0 %v270
    %v310 = vpop.f32.mrb[0].mxu0
    %v311 = vadd.f32 0.0, %v310
    %v312 = vpop.f32.mrb[0].mxu0
    %v313 = vpop.f32.mrb[0].mxu0
    %v314 = vpop.f32.mrb[0].mxu0
    %315 = vdwg.mxu0
    %v317 = vsel %vm268, %v264, 0
    %319 = vmatprep.subr.bf16.mxu0 0
    %320 = vmatpush1.bf16.msra.mxu0 %v274
    %321 = vmatprep.subr.bf16.mxu0 0
    %322 = vmatpush1.bf16.msra.mxu0 0
    %323 = vmatprep.subr.bf16.mxu0 0
    %324 = vmatpush1.bf16.msra.mxu0 0
    %325 = vmatprep.subr.bf16.mxu0 0
    %326 = vmatpush1.bf16.msra.mxu0 0
    %327 = vmatprep.subr.bf16.mxu0 0
    %328 = vmatpush1.bf16.msra.mxu0 0
    %329 = vmatprep.subr.bf16.mxu0 0
    %330 = vmatpush1.bf16.msra.mxu0 0
    %331 = vmatprep.subr.bf16.mxu0 0
    %332 = vmatpush1.bf16.msra.mxu0 0
    %333 = vmatprep.subr.bf16.mxu0 0
    %334 = vmatpush1.bf16.msra.mxu0 0
    %335 = vmatprep.subr.bf16.mxu0 0
    %336 = vmatpush1.bf16.msra.mxu0 0
    %337 = vmatprep.subr.bf16.mxu0 0
    %338 = vmatpush1.bf16.msra.mxu0 0
    %339 = vmatprep.subr.bf16.mxu0 0
    %340 = vmatpush1.bf16.msra.mxu0 0
    %341 = vmatprep.subr.bf16.mxu0 0
    %342 = vmatpush1.bf16.msra.mxu0 0
    %343 = vmatprep.subr.bf16.mxu0 0
    %344 = vmatpush1.bf16.msra.mxu0 0
    %345 = vmatprep.subr.bf16.mxu0 0
    %346 = vmatpush1.bf16.msra.mxu0 0
    %347 = vmatprep.subr.bf16.mxu0 0
    %348 = vmatpush1.bf16.msra.mxu0 0
    %349 = vmatprep.subr.bf16.mxu0 0
    %350 = vmatpush1.bf16.msra.mxu0 0
    %351 = vmatprep.mubr.bf16.mxu0 0
    %352 = vmatmul.mubr.bf16.gmra.mrb[0].mxu0 %v317
    %v353 = vpop.f32.mrb[0].mxu0
    %v354 = vadd.f32 %v311, %v353
    %v355 = vpop.f32.mrb[0].mxu0
    %v356 = vpop.f32.mrb[0].mxu0
    %v357 = vpop.f32.mrb[0].mxu0
    %358 = vdwg.mxu0
    %v359 = vpack.c.bf16 %v262, %v262
    %v360 = vunpack.c.l.bf16 %v359
    %v361 = vsub.f32 %v262, %v360
    %v362 = vpack.c.bf16 %v361, %v361
    %v364 = vsel %vm268, %v362, 0
    %366 = vmatprep.subr.bf16.mxu0 0
    %367 = vmatpush1.bf16.msra.mxu0 %v274
    %368 = vmatprep.subr.bf16.mxu0 0
    %369 = vmatpush1.bf16.msra.mxu0 0
    %370 = vmatprep.subr.bf16.mxu0 0
    %371 = vmatpush1.bf16.msra.mxu0 0
    %372 = vmatprep.subr.bf16.mxu0 0
    %373 = vmatpush1.bf16.msra.mxu0 0
    %374 = vmatprep.subr.bf16.mxu0 0
    %375 = vmatpush1.bf16.msra.mxu0 0
    %376 = vmatprep.subr.bf16.mxu0 0
    %377 = vmatpush1.bf16.msra.mxu0 0
    %378 = vmatprep.subr.bf16.mxu0 0
    %379 = vmatpush1.bf16.msra.mxu0 0
    %380 = vmatprep.subr.bf16.mxu0 0
    %381 = vmatpush1.bf16.msra.mxu0 0
    %382 = vmatprep.subr.bf16.mxu0 0
    %383 = vmatpush1.bf16.msra.mxu0 0
    %384 = vmatprep.subr.bf16.mxu0 0
    %385 = vmatpush1.bf16.msra.mxu0 0
    %386 = vmatprep.subr.bf16.mxu0 0
    %387 = vmatpush1.bf16.msra.mxu0 0
    %388 = vmatprep.subr.bf16.mxu0 0
    %389 = vmatpush1.bf16.msra.mxu0 0
    %390 = vmatprep.subr.bf16.mxu0 0
    %391 = vmatpush1.bf16.msra.mxu0 0
    %392 = vmatprep.subr.bf16.mxu0 0
    %393 = vmatpush1.bf16.msra.mxu0 0
    %394 = vmatprep.subr.bf16.mxu0 0
    %395 = vmatpush1.bf16.msra.mxu0 0
    %396 = vmatprep.subr.bf16.mxu0 0
    %397 = vmatpush1.bf16.msra.mxu0 0
    %398 = vmatprep.mubr.bf16.mxu0 0
    %399 = vmatmul.mubr.bf16.gmra.mrb[0].mxu0 %v364
    %v400 = vpop.f32.mrb[0].mxu0
    %v401 = vadd.f32 0.0, %v400
    %v402 = vpop.f32.mrb[0].mxu0
    %v403 = vpop.f32.mrb[0].mxu0
    %v404 = vpop.f32.mrb[0].mxu0
    %405 = vdwg.mxu0
    %v407 = vsel %vm268, %v359, 0
    %409 = vmatprep.subr.bf16.mxu0 0
    %410 = vmatpush1.bf16.msra.mxu0 %v274
    %411 = vmatprep.subr.bf16.mxu0 0
    %412 = vmatpush1.bf16.msra.mxu0 0
    %413 = vmatprep.subr.bf16.mxu0 0
    %414 = vmatpush1.bf16.msra.mxu0 0
    %415 = vmatprep.subr.bf16.mxu0 0
    %416 = vmatpush1.bf16.msra.mxu0 0
    %417 = vmatprep.subr.bf16.mxu0 0
    %418 = vmatpush1.bf16.msra.mxu0 0
    %419 = vmatprep.subr.bf16.mxu0 0
    %420 = vmatpush1.bf16.msra.mxu0 0
    %421 = vmatprep.subr.bf16.mxu0 0
    %422 = vmatpush1.bf16.msra.mxu0 0
    %423 = vmatprep.subr.bf16.mxu0 0
    %424 = vmatpush1.bf16.msra.mxu0 0
    %425 = vmatprep.subr.bf16.mxu0 0
    %426 = vmatpush1.bf16.msra.mxu0 0
    %427 = vmatprep.subr.bf16.mxu0 0
    %428 = vmatpush1.bf16.msra.mxu0 0
    %429 = vmatprep.subr.bf16.mxu0 0
    %430 = vmatpush1.bf16.msra.mxu0 0
    %431 = vmatprep.subr.bf16.mxu0 0
    %432 = vmatpush1.bf16.msra.mxu0 0
    %433 = vmatprep.subr.bf16.mxu0 0
    %434 = vmatpush1.bf16.msra.mxu0 0
    %435 = vmatprep.subr.bf16.mxu0 0
    %436 = vmatpush1.bf16.msra.mxu0 0
    %437 = vmatprep.subr.bf16.mxu0 0
    %438 = vmatpush1.bf16.msra.mxu0 0
    %439 = vmatprep.subr.bf16.mxu0 0
    %440 = vmatpush1.bf16.msra.mxu0 0
    %441 = vmatprep.mubr.bf16.mxu0 0
    %442 = vmatmul.mubr.bf16.gmra.mrb[0].mxu0 %v407
    %v443 = vpop.f32.mrb[0].mxu0
    %v444 = vadd.f32 %v401, %v443
    %v445 = vpop.f32.mrb[0].mxu0
    %v446 = vpop.f32.mrb[0].mxu0
    %v447 = vpop.f32.mrb[0].mxu0
    %448 = vdwg.mxu0
    %v449 = vsub.f32 %v22, %v354
    %v450 = vmul.f32 %v449, %v444
    %v451 = vld [vmem:[%s1] sm:$0x1]
    %v453 = vlaneseq
    %v454 = vshrl.u32 %v453, 7
    %v455 = vsub.s32 0, %v454
    %v456 = vrot.slane %v451, %v455
    %v458 = vmul.f32 %v450, %v456
    %v459 = vld [vmem:[%s2] sm:$0x1]
    %v461 = vlaneseq
    %v462 = vshrl.u32 %v461, 7
    %v463 = vsub.s32 0, %v462
    %v464 = vrot.slane %v459, %v463
    %v466 = vadd.f32 %v458, %v464
    %467 = vst [vmem:[#allocation2] sm:$0xff] %v466
    // Predicated region
    $region22: #{tpu_custom_call.1} parent=1 // pred_check
      _
    $region23: #{tpu_custom_call.1} parent=1 // pred_check_branch
      %469 = sbr.rel (0) target = $region25
    $region24: #{tpu_custom_call.1} parent=1 // pred_region
      %s471 = ssub.s32 128, 128
      %472 = vsyncadd [#allocation3], %s471
      %s474 = sshll.u32 [#allocation2], 4
      %s475 = int_to_ptr.vmem [resolvable:$true] %s474
      %477 = dma.vmem_to_hbm [thread:$0]  %s475, 128, %s5, [#allocation3]
    $region25: #{tpu_custom_call.1} parent=1 // pred_fallthru
      _
    // Predicated region
    $region26: #{tpu_custom_call.1} parent=1 // pred_check
      _
    $region27: #{tpu_custom_call.1} parent=1 // pred_check_branch
      %479 = sbr.rel (0) target = $region29
    $region28: #{tpu_custom_call.1} parent=1 // pred_region
      %480 = dma.done [#allocation3], 128
    $region29: #{tpu_custom_call.1} parent=1 // pred_fallthru
      _
    %481 = vsyncpa [#allocation3], 1

</llo_original>
